<compile_context>
chip_gen: v7x
topology: tpu7x:2x2x1
jax: 0.10.0
libtpu: 0.0.40
codegen_flags: <defaults>
</compile_context>

<pallas_src>
import math
from functools import partial

import jax
import jax.numpy as jnp
from jax.experimental import pallas as pl
from jax.experimental.pallas import tpu as pltpu


def _round_up(a, b):
    return ((a + b - 1) // b) * b


def _choose_tile_m(n_tokens, max_tile=1024):
    """Row-tile size: multiple of 16 (bf16 sublane packing), as large as
    possible to amortize per-step overhead, but shrunk so there are >=2 grid
    steps whenever there is enough work to pipeline."""
    t = _round_up(min(n_tokens, max_tile), 16)
    if n_tokens >= 2 * t:
        return t
    half = _round_up(pl.cdiv(n_tokens, 2), 16)
    return max(16, min(t, half))


def _gating_kernel(x_ref, p1_ref, p2_ref, out_ref):
    """One row-tile of tokens: Linear -> GELU -> Linear -> softmax (lane-padded)."""
    d = p1_ref.shape[0] - 1            # input_dim
    h = p2_ref.shape[0] - 1            # hidden_dim

    x = x_ref[...]                                   # (TM, D) bf16
    w1 = p1_ref[:d, :].astype(jnp.bfloat16)          # (D, H)
    b1 = p1_ref[d:, :]                               # (1, H)  f32
    w2 = p2_ref[:h, :].astype(jnp.bfloat16)          # (H, E_PAD)
    b2 = p2_ref[h:, :]                               # (1, E_PAD) f32; padded lanes = -1e30

    # Hidden layer: x @ W1 + b1, exact GELU (erf form == nn.GELU default).
    pre = jnp.dot(x, w1, preferred_element_type=jnp.float32) + b1
    act = 0.5 * pre * (1.0 + jax.lax.erf(pre * (1.0 / math.sqrt(2.0))))

    # Output layer: logits over (padded) experts. Padded lanes carry a huge
    # negative bias so softmax gives them exactly zero probability.
    logits = jnp.dot(act.astype(jnp.bfloat16), w2,
                     preferred_element_type=jnp.float32) + b2

    # Softmax over the (padded) expert axis in float32.
    m = jnp.max(logits, axis=-1, keepdims=True)
    e = jnp.exp(logits - m)
    s = jnp.sum(e, axis=-1, keepdims=True)
    out_ref[...] = (e * pl.reciprocal(s, approx=True)).astype(out_ref.dtype)


def gating_network_forward(x, w1, b1, w2, b2, *, max_tile_m=1024):
    """
    Args:
      x:  (B, S, input_dim) routing input.
      w1: (input_dim, hidden_dim), b1: (1, hidden_dim)
      w2: (hidden_dim, num_experts), b2: (1, num_experts)
    Returns:
      weights:  (B, S, num_experts) dense softmax routing weights.
      aux_loss: scalar 0.0 (softmax gating has no load-balancing loss).
    """
    B, S, D = x.shape
    H = w1.shape[1]
    E = w2.shape[1]
    E_PAD = _round_up(E, 128)          # lane-dense output width
    N = B * S

    tile_m = _choose_tile_m(N, max_tile_m)
    N_pad = _round_up(N, tile_m)

    # Token matrix in bf16 for the MXU (accumulation stays f32 in-kernel).
    x_flat = x.reshape(N, D).astype(jnp.bfloat16)
    if N_pad != N:
        x_flat = jnp.pad(x_flat, ((0, N_pad - N), (0, 0)))

    # Pack (W, b) pairs -> fewer per-step DMA descriptors. Padded expert
    # columns get zero weights and a -1e30 bias.
    p1 = jnp.concatenate([w1, b1], axis=0).astype(jnp.float32)          # (D+1, H)
    w2_pad = jnp.pad(w2.astype(jnp.float32), ((0, 0), (0, E_PAD - E)))
    b2_pad = jnp.concatenate(
        [b2.astype(jnp.float32),
         jnp.full((1, E_PAD - E), -1e30, dtype=jnp.float32)], axis=1)
    p2 = jnp.concatenate([w2_pad, b2_pad], axis=0)                      # (H+1, E_PAD)

    grid = (N_pad // tile_m,)
    out = pl.pallas_call(
        _gating_kernel,
        out_shape=jax.ShapeDtypeStruct((N_pad, E_PAD), x.dtype),
        grid_spec=pltpu.PrefetchScalarGridSpec(
            num_scalar_prefetch=0,
            grid=grid,
            in_specs=[
                pl.BlockSpec((tile_m, D), lambda i: (i, 0)),      # x row-tile
                pl.BlockSpec((D + 1, H), lambda i: (0, 0)),       # [W1; b1]
                pl.BlockSpec((H + 1, E_PAD), lambda i: (0, 0)),   # [W2pad; b2pad]
            ],
            out_specs=pl.BlockSpec((tile_m, E_PAD), lambda i: (i, 0)),
        ),
        compiler_params=pltpu.CompilerParams(
            dimension_semantics=("parallel",)),
    )(x_flat, p1, p2)

    weights = out[:N, :E].reshape(B, S, E)
    aux_loss = jnp.zeros((), dtype=x.dtype)   # softmax gating: zero aux loss
    return weights, aux_loss


def init_params(key, input_dim, hidden_dim, num_experts):
    """Init matching the PyTorch module: N(0, 0.02^2) weights, zero biases."""
    k1, k2 = jax.random.split(key)
    w1 = 0.02 * jax.random.normal(k1, (input_dim, hidden_dim), dtype=jnp.float32)
    b1 = jnp.zeros((1, hidden_dim), dtype=jnp.float32)
    w2 = 0.02 * jax.random.normal(k2, (hidden_dim, num_experts), dtype=jnp.float32)
    b2 = jnp.zeros((1, num_experts), dtype=jnp.float32)
    return w1, b1, w2, b2


# TODO(synk): top_k gating path (topk/scatter, training-time noise projection,
# load-balancing aux loss) not implemented; module is configured with
# gating_type='softmax', whose aux loss is identically zero.

if __name__ == "__main__":
    # Small shapes consistent with the module's forward: (Batch, SeqLen, input_dim).
    B, S, D = 2, 8, 32
    HIDDEN, NUM_EXPERTS = 32, 8

    key = jax.random.PRNGKey(0)
    kx, kp = jax.random.split(key)
    x = jax.random.normal(kx, (B, S, D), dtype=jnp.float32)
    w1, b1, w2, b2 = init_params(kp, D, HIDDEN, NUM_EXPERTS)

    weights, aux_loss = jax.jit(partial(gating_network_forward, max_tile_m=1024))(
        x, w1, b1, w2, b2
    )
    weights = jax.block_until_ready(weights)
    aux_loss = jax.block_until_ready(aux_loss)

    # Pure-JAX reference (f32 end-to-end, exact erf GELU).
    xf = x.reshape(-1, D)
    h_ref = jax.nn.gelu(xf @ w1 + b1, approximate=False)
    logits_ref = h_ref @ w2 + b2
    ref = jax.nn.softmax(logits_ref, axis=-1).reshape(B, S, NUM_EXPERTS)

    row_sums = jnp.sum(weights, axis=-1)
    assert weights.shape == (B, S, NUM_EXPERTS)
    assert bool(jnp.all(weights >= 0.0))
    # bf16 MXU inputs + approx reciprocal -> modest tolerance.
    assert jnp.allclose(row_sums, 1.0, atol=1e-2)
    assert jnp.allclose(weights, ref, atol=1e-2)
    assert float(aux_loss) == 0.0

    print("KERNEL_OK")
</pallas_src>

<mosaic_0001>
module attributes {stable_mosaic.version = 11 : i64} {
  func.func @_gating_kernel(%arg0: i32, %arg1: memref<16x32xbf16, #tpu.memory_space<vmem>>, %arg2: memref<33x32xf32, #tpu.memory_space<vmem>>, %arg3: memref<33x128xf32, #tpu.memory_space<vmem>>, %arg4: memref<16x128xf32, #tpu.memory_space<vmem>>) attributes {dimension_semantics = [#tpu.dimension_semantics<parallel>], iteration_bounds = array<i64: 1>, scalar_prefetch = 0 : i64, scratch_operands = 0 : i64, tpu.core_type = #tpu.core_type<tc>, window_params = [{transform_indices = @transform_0, window_bounds = array<i64: 16, 32>}, {pipeline_mode = #tpu.pipeline_mode<synchronous>, transform_indices = @transform_1, window_bounds = array<i64: 33, 32>}, {pipeline_mode = #tpu.pipeline_mode<synchronous>, transform_indices = @transform_2, window_bounds = array<i64: 33, 128>}, {transform_indices = @transform_3, window_bounds = array<i64: 16, 128>}]} {
    %c0 = arith.constant 0 : index
    %c0_0 = arith.constant 0 : index
    %0 = vector.load %arg1[%c0, %c0_0] : memref<16x32xbf16, #tpu.memory_space<vmem>>, vector<16x32xbf16>
    %c0_1 = arith.constant 0 : index
    %c0_2 = arith.constant 0 : index
    %1 = vector.load %arg2[%c0_1, %c0_2] : memref<33x32xf32, #tpu.memory_space<vmem>>, vector<32x32xf32>
    %2 = arith.truncf %1 : vector<32x32xf32> to vector<32x32xbf16>
    %c32 = arith.constant 32 : index
    %c0_3 = arith.constant 0 : index
    %3 = vector.load %arg2[%c32, %c0_3] : memref<33x32xf32, #tpu.memory_space<vmem>>, vector<1x32xf32>
    %c0_4 = arith.constant 0 : index
    %c0_5 = arith.constant 0 : index
    %4 = vector.load %arg3[%c0_4, %c0_5] : memref<33x128xf32, #tpu.memory_space<vmem>>, vector<32x128xf32>
    %5 = arith.truncf %4 : vector<32x128xf32> to vector<32x128xbf16>
    %c32_6 = arith.constant 32 : index
    %c0_7 = arith.constant 0 : index
    %6 = vector.load %arg3[%c32_6, %c0_7] : memref<33x128xf32, #tpu.memory_space<vmem>>, vector<1x128xf32>
    %cst = arith.constant dense<0.000000e+00> : vector<16x32xf32>
    %7 = tpu.matmul %0, %2, %cst {dimension_numbers = #tpu.dot_dimension_numbers<[1], [0], [0], [1], [0, 0, 1, 1], [], []>} : vector<16x32xbf16>, vector<32x32xbf16>, vector<16x32xf32> -> vector<16x32xf32>
    %8 = vector.broadcast %3 : vector<1x32xf32> to vector<16x32xf32>
    %9 = arith.addf %7, %8 : vector<16x32xf32>
    %cst_8 = arith.constant 5.000000e-01 : f32
    %10 = vector.broadcast %cst_8 : f32 to vector<16x32xf32>
    %11 = arith.mulf %10, %9 : vector<16x32xf32>
    %cst_9 = arith.constant 0.707106769 : f32
    %12 = vector.broadcast %cst_9 : f32 to vector<16x32xf32>
    %13 = arith.mulf %9, %12 : vector<16x32xf32>
    %14 = math.erf %13 : vector<16x32xf32>
    %cst_10 = arith.constant 1.000000e+00 : f32
    %15 = vector.broadcast %cst_10 : f32 to vector<16x32xf32>
    %16 = arith.addf %15, %14 : vector<16x32xf32>
    %17 = arith.mulf %11, %16 : vector<16x32xf32>
    %18 = arith.truncf %17 : vector<16x32xf32> to vector<16x32xbf16>
    %cst_11 = arith.constant dense<0.000000e+00> : vector<16x128xf32>
    %19 = tpu.matmul %18, %5, %cst_11 {dimension_numbers = #tpu.dot_dimension_numbers<[1], [0], [0], [1], [0, 0, 1, 1], [], []>} : vector<16x32xbf16>, vector<32x128xbf16>, vector<16x128xf32> -> vector<16x128xf32>
    %20 = vector.broadcast %6 : vector<1x128xf32> to vector<16x128xf32>
    %21 = arith.addf %19, %20 : vector<16x128xf32>
    %cst_12 = arith.constant dense<0xFF800000> : vector<16xf32>
    %22 = vector.multi_reduction <maximumf>, %21, %cst_12 [1] : vector<16x128xf32> to vector<16xf32>
    %23 = vector.shape_cast %22 : vector<16xf32> to vector<16x1xf32>
    %24 = vector.broadcast %23 : vector<16x1xf32> to vector<16x128xf32>
    %25 = arith.subf %21, %24 : vector<16x128xf32>
    %26 = math.exp %25 : vector<16x128xf32>
    %cst_13 = arith.constant dense<0.000000e+00> : vector<16xf32>
    %27 = vector.multi_reduction <add>, %26, %cst_13 [1] : vector<16x128xf32> to vector<16xf32>
    %28 = vector.shape_cast %27 : vector<16xf32> to vector<16x1xf32>
    %29 = tpu.reciprocal %28 {approx = true} : vector<16x1xf32> -> vector<16x1xf32>
    %30 = vector.broadcast %29 : vector<16x1xf32> to vector<16x128xf32>
    %31 = arith.mulf %26, %30 : vector<16x128xf32>
    %c0_14 = arith.constant 0 : index
    %c0_15 = arith.constant 0 : index
    %32 = vector.load %arg4[%c0_14, %c0_15] : memref<16x128xf32, #tpu.memory_space<vmem>>, vector<16x128xf32>
    tpu.vector_store %arg4[%c0_14, %c0_15], %31 {strides = array<i32>} : memref<16x128xf32, #tpu.memory_space<vmem>>, vector<16x128xf32>,
    return
  }
  func.func @transform_0(%arg0: i32) -> (i32, i32) {
    %c0_i32 = arith.constant 0 : i32
    %c0_i32_0 = arith.constant 0 : i32
    return %arg0, %c0_i32 : i32, i32
  }
  func.func @transform_1(%arg0: i32) -> (i32, i32) {
    %c0_i32 = arith.constant 0 : i32
    %c0_i32_0 = arith.constant 0 : i32
    %c0_i32_1 = arith.constant 0 : i32
    return %c0_i32, %c0_i32_0 : i32, i32
  }
  func.func @transform_2(%arg0: i32) -> (i32, i32) {
    %c0_i32 = arith.constant 0 : i32
    %c0_i32_0 = arith.constant 0 : i32
    %c0_i32_1 = arith.constant 0 : i32
    return %c0_i32, %c0_i32_0 : i32, i32
  }
  func.func @transform_3(%arg0: i32) -> (i32, i32) {
    %c0_i32 = arith.constant 0 : i32
    %c0_i32_0 = arith.constant 0 : i32
    return %arg0, %c0_i32 : i32, i32
  }
}

</mosaic_0001>

<llo_original>
// kernel: gating_network_forward.1
$region0: #{gating_network_forward.1}
  #allocation0 [shape = 'u32[]', space=smem, size = 0x4, offset = 0x4, fixed_abs, tag = 'smem constant byte address 0x4 - core index']
  #allocation1 [shape = 'u32[144,128]{1,0:T(1,128)}', space=vmem, size = 0x12000, scoped, tag = 'internal scratch']
  %s0 = inlined_call_operand.vmem [shape: bf16[16,32], index: 0, kind: input, shape index: {}]
  %s1 = inlined_call_operand.vmem [shape: f32[33,32], index: 1, kind: input, shape index: {}]
  %s2 = inlined_call_operand.vmem [shape: f32[33,128], index: 2, kind: input, shape index: {}]
  %s3 = inlined_call_operand.vmem [shape: f32[16,128], index: 3, kind: output, shape index: {}]
  %s4 = sld [smem:[#allocation0]]
  $region22: #{gating_network_forward.1} parent=0
    _
  %s6 = ssub.s32 1, %s4
  %s7 = scalar_select 0, %s6, %s4
  // Predicated region
  $region2: #{gating_network_forward.1} parent=0 // pred_check
    _
  $region3: #{gating_network_forward.1} parent=0 // pred_check_branch
    %9 = sbr.rel (0) target = $region5
  $region4: #{gating_network_forward.1} parent=0 // pred_region
    _
  $region5: #{gating_network_forward.1} parent=0 // pred_fallthru
    _
  // Predicated region
  $region6: #{gating_network_forward.1} parent=0 // pred_check
    _
  $region7: #{gating_network_forward.1} parent=0 // pred_check_branch
    %11 = sbr.rel (0) target = $region9
  $region8: #{gating_network_forward.1} parent=0 // pred_region
    _
  $region9: #{gating_network_forward.1} parent=0 // pred_fallthru
    _
  // Predicated region
  $region10: #{gating_network_forward.1} parent=0 // pred_check
    _
  $region11: #{gating_network_forward.1} parent=0 // pred_check_branch
    %13 = sbr.rel (0) target = $region13
  $region12: #{gating_network_forward.1} parent=0 // pred_region
    _
  $region13: #{gating_network_forward.1} parent=0 // pred_fallthru
    _
  %v15 = vld [vmem:[%s0] sm:$0xf]
  %v16 = vld [vmem:[%s0 + $0x4] sm:$0xf]
  %v17 = vld [vmem:[%s1] sm:$0xff]
  %v18 = vld [vmem:[%s1 + $0x8] sm:$0xff]
  %v19 = vld [vmem:[%s1 + $0x10] sm:$0xff]
  %v20 = vld [vmem:[%s1 + $0x18] sm:$0xff]
  %v21 = vpack.c.bf16 %v18, %v17
  %v22 = vpack.c.bf16 %v20, %v19
  %v23 = vld [vmem:[%s1 + $0x20] sm:$0x1]
  %v24 = vld [vmem:[%s2] sm:$0xff]
  %v25 = vld [vmem:[%s2 + $0x8] sm:$0xff]
  %v26 = vld [vmem:[%s2 + $0x10] sm:$0xff]
  %v27 = vld [vmem:[%s2 + $0x18] sm:$0xff]
  %v28 = vpack.c.bf16 %v25, %v24
  %v29 = vpack.c.bf16 %v27, %v26
  %v30 = vld [vmem:[%s2 + $0x20] sm:$0x1]
  %v31 = vlaneseq
  %v32 = vshrl.u32 %v31, 7
  %v33 = vsub.s32 0, %v32
  %v34 = vrot.slane %v23, %v33
  %v37 = vunpack.c.l.b16 %v15
  %v38 = vunpack.c.l.b16 %v16
  %v39 = vpack.c.b16 %v38, %v37
  %vm40 = vcmask 261120
  %v42 = vsel %vm40, %v39, 0
  %44 = vmatprep.subr.bf16.mxu0 0
  %45 = vmatpush1.bf16.msra.mxu0 %v21
  %46 = vmatprep.subr.bf16.mxu0 0
  %47 = vmatpush1.bf16.msra.mxu0 %v22
  %48 = vmatprep.subr.bf16.mxu0 0
  %49 = vmatpush1.bf16.msra.mxu0 0
  %50 = vmatprep.subr.bf16.mxu0 0
  %51 = vmatpush1.bf16.msra.mxu0 0
  %52 = vmatprep.subr.bf16.mxu0 0
  %53 = vmatpush1.bf16.msra.mxu0 0
  %54 = vmatprep.subr.bf16.mxu0 0
  %55 = vmatpush1.bf16.msra.mxu0 0
  %56 = vmatprep.subr.bf16.mxu0 0
  %57 = vmatpush1.bf16.msra.mxu0 0
  %58 = vmatprep.subr.bf16.mxu0 0
  %59 = vmatpush1.bf16.msra.mxu0 0
  %60 = vmatprep.subr.bf16.mxu0 0
  %61 = vmatpush1.bf16.msra.mxu0 0
  %62 = vmatprep.subr.bf16.mxu0 0
  %63 = vmatpush1.bf16.msra.mxu0 0
  %64 = vmatprep.subr.bf16.mxu0 0
  %65 = vmatpush1.bf16.msra.mxu0 0
  %66 = vmatprep.subr.bf16.mxu0 0
  %67 = vmatpush1.bf16.msra.mxu0 0
  %68 = vmatprep.subr.bf16.mxu0 0
  %69 = vmatpush1.bf16.msra.mxu0 0
  %70 = vmatprep.subr.bf16.mxu0 0
  %71 = vmatpush1.bf16.msra.mxu0 0
  %72 = vmatprep.subr.bf16.mxu0 0
  %73 = vmatpush1.bf16.msra.mxu0 0
  %74 = vmatprep.subr.bf16.mxu0 0
  %75 = vmatpush1.bf16.msra.mxu0 0
  %76 = vmatprep.mubr.bf16.mxu0 0
  %77 = vmatmul.mubr.bf16.gmra.mrb[0].mxu0 %v42
  %v78 = vpop.f32.mrb[0].mxu0
  %v79 = vadd.f32 %v34, %v78
  %v80 = vpop.f32.mrb[0].mxu0
  %v81 = vpop.f32.mrb[0].mxu0
  %v82 = vadd.f32 %v34, %v81
  %v83 = vpop.f32.mrb[0].mxu0
  %84 = vdwg.mxu0
  %v85 = vmul.f32 %v79, 0.5
  %v86 = vmul.f32 %v82, 0.5
  %v87 = vmul.f32 %v79, 0.70710677
  %v88 = vmul.f32 %v82, 0.70710677
  %v89 = verf.f32.pop %v87
  %v90 = verf.f32.pop %v88
  %v91 = vadd.f32 %v89, 1.0
  %v92 = vadd.f32 %v90, 1.0
  %v93 = vmul.f32 %v85, %v91
  %v94 = vmul.f32 %v86, %v92
  %v95 = vpack.c.bf16 %v94, %v93
  %v96 = vlaneseq
  %v97 = vshrl.u32 %v96, 7
  %v98 = vsub.s32 0, %v97
  %v99 = vrot.slane %v30, %v98
  %v101 = vsel %vm40, %v95, 0
  %103 = vmatprep.subr.bf16.mxu0 0
  %104 = vmatpush1.bf16.msra.mxu0 %v28
  %105 = vmatprep.subr.bf16.mxu0 0
  %106 = vmatpush1.bf16.msra.mxu0 %v29
  %107 = vmatprep.subr.bf16.mxu0 0
  %108 = vmatpush1.bf16.msra.mxu0 0
  %109 = vmatprep.subr.bf16.mxu0 0
  %110 = vmatpush1.bf16.msra.mxu0 0
  %111 = vmatprep.subr.bf16.mxu0 0
  %112 = vmatpush1.bf16.msra.mxu0 0
  %113 = vmatprep.subr.bf16.mxu0 0
  %114 = vmatpush1.bf16.msra.mxu0 0
  %115 = vmatprep.subr.bf16.mxu0 0
  %116 = vmatpush1.bf16.msra.mxu0 0
  %117 = vmatprep.subr.bf16.mxu0 0
  %118 = vmatpush1.bf16.msra.mxu0 0
  %119 = vmatprep.subr.bf16.mxu0 0
  %120 = vmatpush1.bf16.msra.mxu0 0
  %121 = vmatprep.subr.bf16.mxu0 0
  %122 = vmatpush1.bf16.msra.mxu0 0
  %123 = vmatprep.subr.bf16.mxu0 0
  %124 = vmatpush1.bf16.msra.mxu0 0
  %125 = vmatprep.subr.bf16.mxu0 0
  %126 = vmatpush1.bf16.msra.mxu0 0
  %127 = vmatprep.subr.bf16.mxu0 0
  %128 = vmatpush1.bf16.msra.mxu0 0
  %129 = vmatprep.subr.bf16.mxu0 0
  %130 = vmatpush1.bf16.msra.mxu0 0
  %131 = vmatprep.subr.bf16.mxu0 0
  %132 = vmatpush1.bf16.msra.mxu0 0
  %133 = vmatprep.subr.bf16.mxu0 0
  %134 = vmatpush1.bf16.msra.mxu0 0
  %135 = vmatprep.mubr.bf16.mxu0 0
  %136 = vmatmul.mubr.bf16.gmra.mrb[0].mxu0 %v101
  %v137 = vpop.f32.mrb[0].mxu0
  %v138 = vadd.f32 %v99, %v137
  %v139 = vpop.f32.mrb[0].mxu0
  %v140 = vpop.f32.mrb[0].mxu0
  %v141 = vadd.f32 %v99, %v140
  %v142 = vpop.f32.mrb[0].mxu0
  %143 = vdwg.mxu0
  %144 = vmax.xlane.f32.xlu0 %v138
  %v145 = vpop.xlane.xlu0 %144
  %146 = vmax.xlane.f32.xlu0 %v141
  %v147 = vpop.xlane.xlu0 %146
  %v148 = vsub.f32 %v138, %v145
  %v149 = vsub.f32 %v141, %v147
  %v150 = vmul.f32 %v148, 1.442695
  %v151 = vpow.pop %v150
  %v152 = vmul.f32 %v149, 1.442695
  %v153 = vpow.pop %v152
  %154 = vadd.xlane.f32.xlu0 %v151
  %v155 = vpop.xlane.xlu0 %154
  %156 = vadd.xlane.f32.xlu0 %v153
  %v157 = vpop.xlane.xlu0 %156
  %v158 = vrcp.pop %v155
  %v159 = vrcp.pop %v157
  %v160 = vmul.f32 %v151, %v158
  %v161 = vmul.f32 %v153, %v159
  %162 = vst [vmem:[%s3] sm:$0xff] %v160
  %163 = vst [vmem:[%s3 + $0x8] sm:$0xff] %v161
  // Predicated region
  $region14: #{gating_network_forward.1} parent=0 // pred_check
    _
  $region15: #{gating_network_forward.1} parent=0 // pred_check_branch
    %165 = sbr.rel (0) target = $region17
  $region16: #{gating_network_forward.1} parent=0 // pred_region
    _
  $region17: #{gating_network_forward.1} parent=0 // pred_fallthru
    _
  // Predicated region
  $region18: #{gating_network_forward.1} parent=0 // pred_check
    _
  $region19: #{gating_network_forward.1} parent=0 // pred_check_branch
    %167 = sbr.rel (0) target = $region21
  $region20: #{gating_network_forward.1} parent=0 // pred_region
    _
  $region21: #{gating_network_forward.1} parent=0 // pred_fallthru
    _

</llo_original>
